<compile_context>
chip_gen: v6e
topology: v6e:2x2x1
jax: 0.10.0
libtpu: 0.0.40
codegen_flags: <defaults>
</compile_context>

<pallas_src>
import functools
import math

import numpy as np
import jax
import jax.numpy as jnp
from jax.experimental import pallas as pl
from jax.experimental.pallas import tpu as pltpu


def _round_up(x, m):
    return (x + m - 1) // m * m


# ----------------------------- Pallas kernel -------------------------------

def _embed_nd_kernel(n_cols, ids_ref, tab_ref, out_ref):
    """out[n, l] = sign[l] * sin( sum_c ids[n, c] * tab[c, l] ).

    tab rows 0..n_cols-1 are a block-diagonal matrix: per packed token group,
    the per-axis rope frequencies repeated 4x along lanes plus a phase row
    {pi/2, 0, 0, pi/2} activated by a constant 1.0 column in ids.  The last
    row is the per-lane sign {+1, -1, +1, +1}.  Each output lane is therefore
    cos(a), -sin(a), sin(a) or cos(a) -- i.e. the row-major flattening of the
    trailing [[cos,-sin],[sin,cos]] 2x2 of EmbedND -- stored lane-dense with
    no post-processing pass.  Every column of tab has exactly one non-zero
    frequency entry, so the angle product is bit-exact f32 (zeros add exactly).
    """
    pos = ids_ref[...]                           # (TN, n_cols)      f32
    tab = tab_ref[...]                           # (n_cols + 1, WR)  f32
    ang = pos[:, 0:1] * tab[0:1, :]              # (TN, WR)
    for c in range(1, n_cols):                   # tiny static unroll (VPU fma)
        ang = ang + pos[:, c:c + 1] * tab[c:c + 1, :]
    sign = tab[n_cols:n_cols + 1, :]             # (1, WR), exact -sin lane
    out_ref[...] = sign * jnp.sin(ang)           # one EUP push per output lane


# ------------------------------- wrapper ------------------------------------

def _make_table(axes_dim, theta, g, w):
    """(g*(A+1) + 1, g*w) table: block-diagonal omega4 + phase rows + sign row.

    Frequencies are built in float64 (matching torch's float64 omega) then
    cast to f32.
    """
    A = len(axes_dim)
    A1 = A + 1
    wr = g * w

    freq4 = np.zeros((A, w), np.float64)
    off = 0
    for i, d in enumerate(axes_dim):
        half = d // 2
        sc = np.arange(0, d, 2, dtype=np.float64) / d
        freq4[i, 4 * off:4 * (off + half)] = np.repeat(1.0 / (theta ** sc), 4)
        off += half

    q = np.arange(w) % 4
    phase4 = np.where((q == 0) | (q == 3), np.pi / 2, 0.0)   # cos lanes
    sign4 = np.where(q == 1, -1.0, 1.0)                      # -sin lane

    tab = np.zeros((g * A1 + 1, wr), np.float64)
    for gg in range(g):
        tab[gg * A1:gg * A1 + A, gg * w:(gg + 1) * w] = freq4
        tab[gg * A1 + A, gg * w:(gg + 1) * w] = phase4
    tab[g * A1, :] = np.tile(sign4, g)
    return tab.astype(np.float32)


@functools.partial(jax.jit, static_argnames=("axes_dim", "theta", "tile_n"))
def embed_nd(ids, axes_dim, theta, tile_n=2048):
    """EmbedND.forward: ids (B, L, n_axes) -> (B, L, 1, sum(axes_dim)//2, 2, 2)."""
    B, L, A = ids.shape
    axes_dim = tuple(axes_dim)
    assert len(axes_dim) == A
    assert all(d % 2 == 0 for d in axes_dim)

    dh = sum(d // 2 for d in axes_dim)
    W = 4 * dh                                  # final row width per token
    G = 128 // math.gcd(W, 128)                 # tokens packed per output row
    WR = G * W                                  # lane width: multiple of 128, zero padding
    A1 = A + 1                                  # +1 ones column driving the phase row

    N = B * L
    NR = -(-N // G)                             # packed rows needed
    # Large token tile (fewer grid steps -> closer to HBM roofline) but capped
    # so the "parallel" axis keeps >= 2 steps to feed both v7x TensorCores.
    tn = max(8, min(tile_n, _round_up((NR + 1) // 2, 8)))
    n_pad = _round_up(NR, tn)

    ids_f = jnp.concatenate(
        [ids.reshape(N, A).astype(jnp.float32), jnp.ones((N, 1), jnp.float32)],
        axis=1)                                                  # (N, A1)
    ids_f = jnp.pad(ids_f, ((0, n_pad * G - N), (0, 0)))         # pad tokens
    ids_f = ids_f.reshape(n_pad, G * A1)                         # pack G per row

    table = jnp.asarray(_make_table(axes_dim, theta, G, W))      # (G*A1+1, WR)

    out_p = pl.pallas_call(
        functools.partial(_embed_nd_kernel, G * A1),
        out_shape=jax.ShapeDtypeStruct((n_pad, WR), jnp.float32),
        grid=(n_pad // tn,),
        in_specs=[pl.BlockSpec((tn, G * A1), lambda i: (i, 0)),
                  pl.BlockSpec((G * A1 + 1, WR), lambda i: (0, 0))],
        out_specs=pl.BlockSpec((tn, WR), lambda i: (i, 0)),
        compiler_params=pltpu.CompilerParams(
            dimension_semantics=("parallel",),
            vmem_limit_bytes=32 * 1024 * 1024),
    )(ids_f, table)

    # Rows already hold the final element order; only boundary slicing remains.
    emb = out_p[:NR].reshape(NR * G, W)[:N]
    return emb.reshape(B, L, 1, dh, 2, 2)


# ------------------------------ reference -----------------------------------

def _embed_nd_ref(ids_np, axes_dim, theta):
    """Pure-numpy float64 reference (matches torch's float64 rope), cast to f32."""
    B, L, _ = ids_np.shape
    parts = []
    for i, d in enumerate(axes_dim):
        half = d // 2
        sc = np.arange(0, d, 2, dtype=np.float64) / d
        omega = 1.0 / (theta ** sc)
        ang = ids_np[..., i].astype(np.float64)[..., None] * omega   # (B,L,half)
        cos, sin = np.cos(ang), np.sin(ang)
        parts.append(np.stack([cos, -sin, sin, cos], axis=-1)
                     .reshape(B, L, half, 2, 2))
    emb = np.concatenate(parts, axis=-3)
    return emb[:, :, None].astype(np.float32)                        # unsqueeze(2)


# --------------------------------- main --------------------------------------

if __name__ == "__main__":
    theta = 10000

    # Small test shape: dh=16 -> W=64 -> G=2 tokens packed per 128-lane row.
    axes_dim = (16, 8, 8)
    B, L = 2, 8
    key = jax.random.PRNGKey(0)
    ids = jax.random.randint(key, (B, L, len(axes_dim)), 0, 32, dtype=jnp.int32)

    out = jax.block_until_ready(embed_nd(ids, axes_dim, theta))
    ref = _embed_nd_ref(np.asarray(ids), axes_dim, theta)
    assert out.shape == (B, L, 1, sum(axes_dim) // 2, 2, 2), out.shape
    err = float(np.max(np.abs(np.asarray(out) - ref)))
    assert err < 1e-4, err

    # HiDream-like dims: dh=64 -> W=256 (G=1, no packing), grid of 2 steps.
    axes_dim2 = (64, 32, 32)
    ids2 = jax.random.randint(jax.random.PRNGKey(0), (1, 1024, 3), 0, 32,
                              dtype=jnp.int32)
    out2 = jax.block_until_ready(embed_nd(ids2, axes_dim2, theta))
    ref2 = _embed_nd_ref(np.asarray(ids2), axes_dim2, theta)
    assert out2.shape == (1, 1024, 1, 64, 2, 2), out2.shape
    err2 = float(np.max(np.abs(np.asarray(out2) - ref2)))
    assert err2 < 1e-4, err2

    print("KERNEL_OK")
</pallas_src>

<mosaic_0001>
module attributes {stable_mosaic.version = 11 : i64} {
  func.func @_embed_nd_kernel(%arg0: i32, %arg1: memref<8x8xf32, #tpu.memory_space<vmem>>, %arg2: memref<9x128xf32, #tpu.memory_space<vmem>>, %arg3: memref<8x128xf32, #tpu.memory_space<vmem>>) attributes {dimension_semantics = [#tpu.dimension_semantics<parallel>], iteration_bounds = array<i64: 1>, scalar_prefetch = 0 : i64, scratch_operands = 0 : i64, tpu.core_type = #tpu.core_type<tc>, window_params = [{transform_indices = @transform_0, window_bounds = array<i64: 8, 8>}, {pipeline_mode = #tpu.pipeline_mode<synchronous>, transform_indices = @transform_1, window_bounds = array<i64: 9, 128>}, {transform_indices = @transform_2, window_bounds = array<i64: 8, 128>}]} {
    %c0 = arith.constant 0 : index
    %c0_0 = arith.constant 0 : index
    %0 = vector.load %arg1[%c0, %c0_0] : memref<8x8xf32, #tpu.memory_space<vmem>>, vector<8x8xf32>
    %c0_1 = arith.constant 0 : index
    %c0_2 = arith.constant 0 : index
    %1 = vector.load %arg2[%c0_1, %c0_2] : memref<9x128xf32, #tpu.memory_space<vmem>>, vector<9x128xf32>
    %2 = vector.extract_strided_slice %0 {offsets = [0, 0], sizes = [8, 1], strides = [1, 1]} : vector<8x8xf32> to vector<8x1xf32>
    %3 = vector.extract_strided_slice %1 {offsets = [0, 0], sizes = [1, 128], strides = [1, 1]} : vector<9x128xf32> to vector<1x128xf32>
    %4 = vector.broadcast %2 : vector<8x1xf32> to vector<8x128xf32>
    %5 = vector.broadcast %3 : vector<1x128xf32> to vector<8x128xf32>
    %6 = arith.mulf %4, %5 : vector<8x128xf32>
    %7 = vector.extract_strided_slice %0 {offsets = [0, 1], sizes = [8, 1], strides = [1, 1]} : vector<8x8xf32> to vector<8x1xf32>
    %8 = vector.extract_strided_slice %1 {offsets = [1, 0], sizes = [1, 128], strides = [1, 1]} : vector<9x128xf32> to vector<1x128xf32>
    %9 = vector.broadcast %7 : vector<8x1xf32> to vector<8x128xf32>
    %10 = vector.broadcast %8 : vector<1x128xf32> to vector<8x128xf32>
    %11 = arith.mulf %9, %10 : vector<8x128xf32>
    %12 = arith.addf %6, %11 : vector<8x128xf32>
    %13 = vector.extract_strided_slice %0 {offsets = [0, 2], sizes = [8, 1], strides = [1, 1]} : vector<8x8xf32> to vector<8x1xf32>
    %14 = vector.extract_strided_slice %1 {offsets = [2, 0], sizes = [1, 128], strides = [1, 1]} : vector<9x128xf32> to vector<1x128xf32>
    %15 = vector.broadcast %13 : vector<8x1xf32> to vector<8x128xf32>
    %16 = vector.broadcast %14 : vector<1x128xf32> to vector<8x128xf32>
    %17 = arith.mulf %15, %16 : vector<8x128xf32>
    %18 = arith.addf %12, %17 : vector<8x128xf32>
    %19 = vector.extract_strided_slice %0 {offsets = [0, 3], sizes = [8, 1], strides = [1, 1]} : vector<8x8xf32> to vector<8x1xf32>
    %20 = vector.extract_strided_slice %1 {offsets = [3, 0], sizes = [1, 128], strides = [1, 1]} : vector<9x128xf32> to vector<1x128xf32>
    %21 = vector.broadcast %19 : vector<8x1xf32> to vector<8x128xf32>
    %22 = vector.broadcast %20 : vector<1x128xf32> to vector<8x128xf32>
    %23 = arith.mulf %21, %22 : vector<8x128xf32>
    %24 = arith.addf %18, %23 : vector<8x128xf32>
    %25 = vector.extract_strided_slice %0 {offsets = [0, 4], sizes = [8, 1], strides = [1, 1]} : vector<8x8xf32> to vector<8x1xf32>
    %26 = vector.extract_strided_slice %1 {offsets = [4, 0], sizes = [1, 128], strides = [1, 1]} : vector<9x128xf32> to vector<1x128xf32>
    %27 = vector.broadcast %25 : vector<8x1xf32> to vector<8x128xf32>
    %28 = vector.broadcast %26 : vector<1x128xf32> to vector<8x128xf32>
    %29 = arith.mulf %27, %28 : vector<8x128xf32>
    %30 = arith.addf %24, %29 : vector<8x128xf32>
    %31 = vector.extract_strided_slice %0 {offsets = [0, 5], sizes = [8, 1], strides = [1, 1]} : vector<8x8xf32> to vector<8x1xf32>
    %32 = vector.extract_strided_slice %1 {offsets = [5, 0], sizes = [1, 128], strides = [1, 1]} : vector<9x128xf32> to vector<1x128xf32>
    %33 = vector.broadcast %31 : vector<8x1xf32> to vector<8x128xf32>
    %34 = vector.broadcast %32 : vector<1x128xf32> to vector<8x128xf32>
    %35 = arith.mulf %33, %34 : vector<8x128xf32>
    %36 = arith.addf %30, %35 : vector<8x128xf32>
    %37 = vector.extract_strided_slice %0 {offsets = [0, 6], sizes = [8, 1], strides = [1, 1]} : vector<8x8xf32> to vector<8x1xf32>
    %38 = vector.extract_strided_slice %1 {offsets = [6, 0], sizes = [1, 128], strides = [1, 1]} : vector<9x128xf32> to vector<1x128xf32>
    %39 = vector.broadcast %37 : vector<8x1xf32> to vector<8x128xf32>
    %40 = vector.broadcast %38 : vector<1x128xf32> to vector<8x128xf32>
    %41 = arith.mulf %39, %40 : vector<8x128xf32>
    %42 = arith.addf %36, %41 : vector<8x128xf32>
    %43 = vector.extract_strided_slice %0 {offsets = [0, 7], sizes = [8, 1], strides = [1, 1]} : vector<8x8xf32> to vector<8x1xf32>
    %44 = vector.extract_strided_slice %1 {offsets = [7, 0], sizes = [1, 128], strides = [1, 1]} : vector<9x128xf32> to vector<1x128xf32>
    %45 = vector.broadcast %43 : vector<8x1xf32> to vector<8x128xf32>
    %46 = vector.broadcast %44 : vector<1x128xf32> to vector<8x128xf32>
    %47 = arith.mulf %45, %46 : vector<8x128xf32>
    %48 = arith.addf %42, %47 : vector<8x128xf32>
    %49 = vector.extract_strided_slice %1 {offsets = [8, 0], sizes = [1, 128], strides = [1, 1]} : vector<9x128xf32> to vector<1x128xf32>
    %50 = math.sin %48 : vector<8x128xf32>
    %51 = vector.broadcast %49 : vector<1x128xf32> to vector<8x128xf32>
    %52 = arith.mulf %51, %50 : vector<8x128xf32>
    %c0_3 = arith.constant 0 : index
    %c0_4 = arith.constant 0 : index
    %53 = vector.load %arg3[%c0_3, %c0_4] : memref<8x128xf32, #tpu.memory_space<vmem>>, vector<8x128xf32>
    tpu.vector_store %arg3[%c0_3, %c0_4], %52 {strides = array<i32>} : memref<8x128xf32, #tpu.memory_space<vmem>>, vector<8x128xf32>,
    return
  }
  func.func @transform_0(%arg0: i32) -> (i32, i32) {
    %c0_i32 = arith.constant 0 : i32
    %c0_i32_0 = arith.constant 0 : i32
    return %arg0, %c0_i32 : i32, i32
  }
  func.func @transform_1(%arg0: i32) -> (i32, i32) {
    %c0_i32 = arith.constant 0 : i32
    %c0_i32_0 = arith.constant 0 : i32
    %c0_i32_1 = arith.constant 0 : i32
    return %c0_i32, %c0_i32_0 : i32, i32
  }
  func.func @transform_2(%arg0: i32) -> (i32, i32) {
    %c0_i32 = arith.constant 0 : i32
    %c0_i32_0 = arith.constant 0 : i32
    return %arg0, %c0_i32 : i32, i32
  }
}

</mosaic_0001>

<llo_original>
// kernel: embed_nd.1
$region0: #{embed_nd.1}
  #allocation0 [shape = 'u32[]', space=smem, size = 0x4, offset = 0x4, fixed_abs, tag = 'smem constant byte address 0x4 - core index']
  #allocation1 [shape = 'u32[144,128]{1,0:T(1,128)}', space=vmem, size = 0x12000, scoped, tag = 'internal scratch']
  %s0 = inlined_call_operand.vmem [shape: f32[8,8], index: 0, kind: input, shape index: {}]
  %s1 = inlined_call_operand.vmem [shape: f32[9,128], index: 1, kind: input, shape index: {}]
  %s2 = inlined_call_operand.vmem [shape: f32[8,128], index: 2, kind: output, shape index: {}]
  %s3 = sld [smem:[#allocation0]]
  $region18: #{embed_nd.1} parent=0
    _
  %s5 = ssub.s32 1, %s3
  %s6 = scalar_select 0, %s5, %s3
  // Predicated region
  $region2: #{embed_nd.1} parent=0 // pred_check
    _
  $region3: #{embed_nd.1} parent=0 // pred_check_branch
    %8 = sbr.rel (0) target = $region5
  $region4: #{embed_nd.1} parent=0 // pred_region
    _
  $region5: #{embed_nd.1} parent=0 // pred_fallthru
    _
  // Predicated region
  $region6: #{embed_nd.1} parent=0 // pred_check
    _
  $region7: #{embed_nd.1} parent=0 // pred_check_branch
    %10 = sbr.rel (0) target = $region9
  $region8: #{embed_nd.1} parent=0 // pred_region
    _
  $region9: #{embed_nd.1} parent=0 // pred_fallthru
    _
  %v11 = vld [vmem:[%s0] sm:$0xff]
  %v12 = vld [vmem:[%s1] sm:$0xff]
  %v13 = vld [vmem:[%s1 + $0x8] sm:$0x1]
  %15 = vset.pattern.permute.xlu0 0
  %16 = vperm.xlu0 %15, %v11
  %v17 = vpop.permute.xlu0 %16
  %v19 = vlaneseq
  %v20 = vshrl.u32 %v19, 7
  %v21 = vsub.s32 0, %v20
  %v22 = vrot.slane %v12, %v21
  %v23 = vmul.f32 %v17, %v22
  %24 = vset.pattern.permute.xlu0 1
  %25 = vperm.xlu0 %24, %v11
  %v26 = vpop.permute.xlu0 %25
  %v28 = vlaneseq
  %v29 = vshrl.u32 %v28, 7
  %v30 = vsub.s32 1, %v29
  %v31 = vrot.slane %v12, %v30
  %v32 = vmul.f32 %v26, %v31
  %v33 = vadd.f32 %v23, %v32
  %34 = vset.pattern.permute.xlu0 2
  %35 = vperm.xlu0 %34, %v11
  %v36 = vpop.permute.xlu0 %35
  %v38 = vlaneseq
  %v39 = vshrl.u32 %v38, 7
  %v40 = vsub.s32 2, %v39
  %v41 = vrot.slane %v12, %v40
  %v42 = vmul.f32 %v36, %v41
  %v43 = vadd.f32 %v33, %v42
  %44 = vset.pattern.permute.xlu0 3
  %45 = vperm.xlu0 %44, %v11
  %v46 = vpop.permute.xlu0 %45
  %v48 = vlaneseq
  %v49 = vshrl.u32 %v48, 7
  %v50 = vsub.s32 3, %v49
  %v51 = vrot.slane %v12, %v50
  %v52 = vmul.f32 %v46, %v51
  %v53 = vadd.f32 %v43, %v52
  %54 = vset.pattern.permute.xlu0 4
  %55 = vperm.xlu0 %54, %v11
  %v56 = vpop.permute.xlu0 %55
  %v58 = vlaneseq
  %v59 = vshrl.u32 %v58, 7
  %v60 = vsub.s32 4, %v59
  %v61 = vrot.slane %v12, %v60
  %v62 = vmul.f32 %v56, %v61
  %v63 = vadd.f32 %v53, %v62
  %64 = vset.pattern.permute.xlu0 5
  %65 = vperm.xlu0 %64, %v11
  %v66 = vpop.permute.xlu0 %65
  %v68 = vlaneseq
  %v69 = vshrl.u32 %v68, 7
  %v70 = vsub.s32 5, %v69
  %v71 = vrot.slane %v12, %v70
  %v72 = vmul.f32 %v66, %v71
  %v73 = vadd.f32 %v63, %v72
  %74 = vset.pattern.permute.xlu0 6
  %75 = vperm.xlu0 %74, %v11
  %v76 = vpop.permute.xlu0 %75
  %v78 = vlaneseq
  %v79 = vshrl.u32 %v78, 7
  %v80 = vsub.s32 6, %v79
  %v81 = vrot.slane %v12, %v80
  %v82 = vmul.f32 %v76, %v81
  %v83 = vadd.f32 %v73, %v82
  %84 = vset.pattern.permute.xlu0 7
  %85 = vperm.xlu0 %84, %v11
  %v86 = vpop.permute.xlu0 %85
  %v88 = vlaneseq
  %v89 = vshrl.u32 %v88, 7
  %v90 = vsub.s32 7, %v89
  %v91 = vrot.slane %v12, %v90
  %v92 = vmul.f32 %v86, %v91
  %v93 = vadd.f32 %v83, %v92
  %v94 = vand.u32 2147483647, %v93
  %vm95 = vcmp.le.f32.partialorder %v94, 0.7853982
  %vm96 = vcmp.lt.s32.totalorder %v93, 0
  %v97 = vand.u32 %v93, 2139095040
  %v98 = vshrl.u32 %v97, 23
  %v99 = vsub.s32 %v98, 127
  %v100 = vand.u32 2147483647, %v93
  %v101 = vand.u32 %v100, 8388607
  %v102 = vor.u32 %v101, 8388608
  %v103 = vsub.s32 0, %v102
  %v104 = vadd.s32 %v99, 1
  %vm105 = vcmp.gt.s32.totalorder %v104, 0
  %v106 = vsel %vm105, %v104, 0
  %v107 = vshrl.u32 %v106, 5
  %v108 = vand.u32 %v106, 31
  %v109 = vsub.s32 32, %v108
  %v110 = vshrl.u32 683565275, %v109
  %v111 = vshll.u32 683565275, %v108
  %v112 = vshrl.u32 2475754826, %v109
  %v113 = vor.u32 %v111, %v112
  %v114 = vshll.u32 2475754826, %v108
  %v115 = vshrl.u32 2131351028, %v109
  %v116 = vor.u32 %v114, %v115
  %v117 = vshll.u32 2131351028, %v108
  %v118 = vshrl.u32 2102212464, %v109
  %v119 = vor.u32 %v117, %v118
  %v120 = vshll.u32 2102212464, %v108
  %v121 = vshrl.u32 920167782, %v109
  %v122 = vor.u32 %v120, %v121
  %v123 = vshll.u32 920167782, %v108
  %v124 = vshrl.u32 1326507024, %v109
  %v125 = vor.u32 %v123, %v124
  %vm126 = vcmp.lt.s32.totalorder %v107, 1
  %vm127 = vcmp.lt.s32.totalorder %v107, 2
  %vm128 = vcmp.lt.s32.totalorder %v107, 3
  %vm129 = vcmp.lt.s32.totalorder %v107, 4
  %v130 = vsel %vm126, %v110, %v113
  %v131 = vsel %vm129, %v119, 2102212464
  %v132 = vsel %vm128, %v116, %v131
  %v133 = vsel %vm127, %v130, %v132
  %v134 = vsel %vm126, %v113, %v116
  %v135 = vsel %vm129, %v122, 920167782
  %v136 = vsel %vm128, %v119, %v135
  %v137 = vsel %vm127, %v134, %v136
  %v138 = vsel %vm126, %v116, %v119
  %v139 = vsel %vm129, %v125, 1326507024
  %v140 = vsel %vm128, %v122, %v139
  %v141 = vsel %vm127, %v138, %v140
  %v142 = vshll.u32 %v102, 8
  %v143 = vmul.u32.u64.compose %v142, %v141
  %v144 = vextract.low.u32 %v143
  %v145 = vextract.high.u32 %v143
  %v146 = vmul.u32.u64.compose %v142, %v137
  %v147 = vextract.low.u32 %v146
  %v148 = vextract.high.u32 %v146
  %v149 = vmul.u32 %v142, %v133
  %v150 = vadd.s32 %v145, %v147
  %vm151 = vc.u32 %v145, %v147
  %v152 = vadd.s32 %v148, 1
  %v153 = vsel %vm151, %v152, %v148
  %v154 = vadd.s32 %v149, %v153
  %v155 = vadd.s32 %v154, 536870912
  %v156 = vshrl.u32 %v155, 30
  %v157 = vshll.u32 %v156, 30
  %v158 = vsub.s32 %v154, %v157
  %vm159 = vcmp.lt.s32.totalorder %v158, 0
  %v160 = vsub.s32 0, %v158
  %v161 = vsel %vm159, %v160, %v158
  %v162 = vclz %v161
  %v163 = vsub.s32 %v162, 2
  %vm164 = vcmp.gt.s32.totalorder 0, %v163
  %v165 = vsel %vm164, 0, %v163
  %v166 = vsub.s32 32, %v165
  %v167 = vshll.u32 %v158, %v165
  %v168 = vshrl.u32 %v150, %v166
  %v169 = vor.u32 %v167, %v168
  %v170 = vsub.s32 4294967266, %v165
  %v171 = vadd.s32 %v170, 127
  %v172 = vshll.u32 %v171, 23
  %v173 = vor.u32 4788187, %v172
  %v174 = vand.u32 2147483647, %v173
  %v176 = vcvt.s32.f32 %v169
  %v177 = vmul.f32 %v176, %v174
  %v178 = vxor.u32 %v177, 2147483648
  %v179 = vsel %vm96, %v178, %v177
  %v180 = vsub.s32 4, %v156
  %v181 = vsel %vm96, %v180, %v156
  %v182 = vsel %vm95, %v93, %v179
  %v183 = vsel %vm95, 0, %v181
  %v184 = vcosq.f32.pop %v182
  %v185 = vsinq.f32.pop %v182
  %vm186 = vweird.f32 %v93
  %v187 = vadd.s32 %v183, 3
  %v188 = vand.u32 %v187, 3
  %vm189 = vcmp.lt.s32.totalorder %v188, 2
  %vm190 = vcmp.eq.s32.totalorder %v188, 0
  %v191 = vxor.u32 %v185, 2147483648
  %v192 = vsel %vm190, %v184, %v191
  %vm193 = vcmp.eq.s32.totalorder %v188, 2
  %v194 = vxor.u32 %v184, 2147483648
  %v195 = vsel %vm193, %v194, %v185
  %v196 = vsel %vm189, %v192, %v195
  %v197 = vsel %vm186, nan, %v196
  %v198 = vlaneseq
  %v199 = vshrl.u32 %v198, 7
  %v200 = vsub.s32 0, %v199
  %v201 = vrot.slane %v13, %v200
  %v202 = vmul.f32 %v201, %v197
  %203 = vst [vmem:[%s2] sm:$0xff] %v202
  // Predicated region
  $region10: #{embed_nd.1} parent=0 // pred_check
    _
  $region11: #{embed_nd.1} parent=0 // pred_check_branch
    %205 = sbr.rel (0) target = $region13
  $region12: #{embed_nd.1} parent=0 // pred_region
    _
  $region13: #{embed_nd.1} parent=0 // pred_fallthru
    _
  // Predicated region
  $region14: #{embed_nd.1} parent=0 // pred_check
    _
  $region15: #{embed_nd.1} parent=0 // pred_check_branch
    %207 = sbr.rel (0) target = $region17
  $region16: #{embed_nd.1} parent=0 // pred_region
    _
  $region17: #{embed_nd.1} parent=0 // pred_fallthru
    _

</llo_original>
